<compile_context>
chip_gen: v6e
topology: v6e:2x2x1
jax: 0.10.0
libtpu: 0.0.40
codegen_flags: <defaults>
</compile_context>

<pallas_src>
import functools

import jax
import jax.numpy as jnp
from jax.experimental import pallas as pl
from jax.experimental.pallas import tpu as pltpu


# --------------------------------------------------------------------------
# Kernels
# --------------------------------------------------------------------------
def _prompt_only_kernel(prompt_ref, x_hbm_ref, o_ref):
    # P is a multiple of 128: every column of this output slab is prompt.
    # x_hbm_ref is the aliased input left in HBM (pl.ANY); never touched.
    del x_hbm_ref
    Bb = o_ref.shape[0]

    @pl.loop(0, Bb, unroll=Bb <= 8)
    def _(b):
        o_ref[b] = prompt_ref[0]


def _prompt_boundary_kernel(prompt_ref, x_ref, o_ref, *, prompt_length, n_full):
    # prompt_ref: (1, M, block_T); x_ref: (Bb, M, x_blk); o_ref: (Bb, M, block_T)
    P = prompt_length
    Bb, M, block_T = o_ref.shape
    rem = block_T - n_full  # 0 < rem <= 128 (the single boundary lane tile)

    if n_full > 0:
        # Columns [0, n_full): pure prompt.  Store one batch row at a time so
        # live vreg ranges stay bounded (no (Bb, M, n_full) materialization).
        @pl.loop(0, Bb, unroll=Bb <= 8)
        def _(b):
            o_ref[b, :, :n_full] = prompt_ref[0, :, :n_full]

    # Boundary tile [n_full, block_T): contains the prompt/input split.
    # Lane-only iota; jnp.where broadcasts it over (Bb, M).
    t_idx = jax.lax.broadcasted_iota(jnp.int32, (1, 1, rem), 2) + n_full
    prom = prompt_ref[:, :, n_full:]      # (1, M, rem)
    xb = x_ref[:, :, :rem]                # (Bb, M, rem)
    o_ref[:, :, n_full:] = jnp.where(t_idx < P, prom, xb)


# --------------------------------------------------------------------------
# Host-side tiling helpers
# --------------------------------------------------------------------------
def _tensorcores_per_chip():
    # v7x has 2 TensorCores per chip; v5e/v6e have 1.  Safe fallback: 1.
    try:
        kind = jax.devices()[0].device_kind.lower()
    except Exception:
        return 1
    if "v7" in kind or "tpu7" in kind:
        return 2
    return 1


def _choose_batch_block(B, out_bytes_per_batch, num_tc, target_bytes=4 << 20):
    # Largest Bb whose output tile is ~<= 4 MiB (double-buffered this keeps the
    # footprint far below every generation's scoped-VMEM budget while pushing
    # toward HBM roofline).  On multi-TC chips (v7x) keep >= 2 grid steps per
    # core so each core still pipelines input DMA against output writeback.
    bb = max(1, min(B, target_bytes // max(1, out_bytes_per_batch)))
    if num_tc > 1:
        if B >= 2 * num_tc:
            bb = min(bb, max(1, B // (2 * num_tc)))
        elif B >= num_tc:
            bb = min(bb, pl.cdiv(B, num_tc))
    return bb


# --------------------------------------------------------------------------
# Forward
# --------------------------------------------------------------------------
def _soft_prompting_forward_impl(input_features, soft_prompt, batch_block=None):
    """input_features: (B, M, T) ; soft_prompt: (1, M, P) with 0 < P <= T."""
    B, M, T = input_features.shape
    _, Mp, P = soft_prompt.shape
    assert Mp == M and 0 < P <= T

    dtype = input_features.dtype
    itemsize = jnp.dtype(dtype).itemsize

    # Slab the kernel writes: [0, block_T).  Columns [0, n_full) are pure
    # prompt; [n_full, block_T) (<=128 lanes) holds the prompt/input split.
    n_full = (P // 128) * 128
    block_T = min(pl.cdiv(P, 128) * 128, T)
    rem = block_T - n_full

    # Prompt padded only to the slab width (never to full T).
    prompt = soft_prompt.astype(dtype)
    if block_T > P:
        prompt = jnp.pad(prompt, ((0, 0), (0, 0), (0, block_T - P)))

    num_tc = _tensorcores_per_chip()
    out_bytes_per_batch = M * block_T * itemsize
    if batch_block is None:
        Bb = _choose_batch_block(B, out_bytes_per_batch, num_tc)
    else:
        Bb = max(1, min(int(batch_block), B))
    grid = (pl.cdiv(B, Bb),)  # non-divisor B handled by masked edge blocks

    if rem == 0:
        # Prompt boundary is 128-aligned: x is never read by the kernel.
        # Keep it as an (aliased) argument but in pl.ANY so no DMA is issued.
        kernel = _prompt_only_kernel
        x_spec = pl.BlockSpec(memory_space=pl.ANY)
        x_tile_bytes = 0
    else:
        # Only the single 128-lane boundary tile of x is ever read.
        x_blk = min(128, T)
        kernel = functools.partial(
            _prompt_boundary_kernel, prompt_length=P, n_full=n_full
        )
        x_spec = pl.BlockSpec((Bb, M, x_blk), lambda b: (b, 0, n_full // x_blk))
        x_tile_bytes = Bb * M * x_blk * itemsize

    # Explicit scoped-VMEM budget: 2x(out tile) + 2x(x tile) + 2x(prompt)
    # plus margin, capped at 48 MiB (safe on v7x's 64 MiB physical VMEM).
    out_tile_bytes = Bb * M * block_T * itemsize
    prompt_bytes = M * block_T * itemsize
    footprint = 2 * (out_tile_bytes + x_tile_bytes + prompt_bytes)
    vmem_limit = int(min(48 << 20, max(32 << 20, footprint + (4 << 20))))

    return pl.pallas_call(
        kernel,
        out_shape=jax.ShapeDtypeStruct((B, M, T), dtype),
        grid_spec=pltpu.PrefetchScalarGridSpec(
            num_scalar_prefetch=0,
            grid=grid,
            in_specs=[
                # Shared prompt slab: constant block index -> resident in VMEM.
                pl.BlockSpec((1, M, block_T), lambda b: (0, 0, 0)),
                x_spec,
            ],
            out_specs=pl.BlockSpec((Bb, M, block_T), lambda b: (b, 0, 0)),
        ),
        # Donate input_features as the output: columns >= block_T are never
        # written and keep the donated input's values.
        input_output_aliases={1: 0},
        compiler_params=pltpu.CompilerParams(
            dimension_semantics=("parallel",),
            vmem_limit_bytes=vmem_limit,
        ),
    )(prompt, input_features)


# jit with the input donated so the pallas-level alias actually reuses the
# buffer (no defensive full (B, M, T) copy).  Callers must not reuse
# input_features after this call.
soft_prompting_forward = jax.jit(
    _soft_prompting_forward_impl,
    static_argnames=("batch_block",),
    donate_argnums=(0,),
)


def init_soft_prompt(key, num_mel_bins, prompt_length, dtype=jnp.float32):
    # Matches nn.init.xavier_uniform_ for a (1, M, P) tensor:
    #   fan_in = M * P, fan_out = 1 * P, bound = sqrt(6 / (fan_in + fan_out))
    fan_in = num_mel_bins * prompt_length
    fan_out = 1 * prompt_length
    bound = (6.0 / (fan_in + fan_out)) ** 0.5
    return jax.random.uniform(
        key, (1, num_mel_bins, prompt_length), dtype=dtype,
        minval=-bound, maxval=bound,
    )


def _reference(input_features, soft_prompt):
    B = input_features.shape[0]
    P = soft_prompt.shape[-1]
    return jnp.concatenate(
        [jnp.broadcast_to(soft_prompt, (B,) + soft_prompt.shape[1:]),
         input_features[:, :, P:]],
        axis=2,
    ).astype(input_features.dtype)


if __name__ == "__main__":
    key = jax.random.PRNGKey(0)

    # (B, M, T, P, batch_block):
    #  1) unaligned prompt boundary -> boundary-tile (masked select) path
    #  2) 128-aligned prompt        -> prompt-only path, x in pl.ANY (no DMA)
    #  3) non-divisor batch blocking (forced Bb=2 for B=3) -> cdiv grid path
    cases = [
        (2, 8, 256, 48, None),
        (2, 16, 384, 128, None),
        (3, 8, 256, 80, 2),
    ]

    for B, M, T, P, bb in cases:
        key, k_prompt, k_x = jax.random.split(key, 3)
        soft_prompt = init_soft_prompt(k_prompt, M, P)
        x = jax.random.normal(k_x, (B, M, T), dtype=jnp.float32)

        # Reference computed (and materialized) before the donating call.
        ref = jax.block_until_ready(_reference(x, soft_prompt))

        out = jax.block_until_ready(
            soft_prompting_forward(x, soft_prompt, batch_block=bb)
        )
        del x  # donated; must not be reused

        assert out.shape == (B, M, T)
        assert jnp.allclose(out, ref), f"mismatch vs reference for {(B, M, T, P, bb)}"

    print("KERNEL_OK")
</pallas_src>

<mosaic_0001>
module attributes {stable_mosaic.version = 11 : i64} {
  func.func @_prompt_boundary_kernel(%arg0: i32, %arg1: memref<1x8x128xf32, #tpu.memory_space<vmem>>, %arg2: memref<2x8x128xf32, #tpu.memory_space<vmem>>, %arg3: memref<2x8x128xf32, #tpu.memory_space<vmem>>) attributes {dimension_semantics = [#tpu.dimension_semantics<parallel>], iteration_bounds = array<i64: 1>, scalar_prefetch = 0 : i64, scratch_operands = 0 : i64, tpu.core_type = #tpu.core_type<tc>, window_params = [{pipeline_mode = #tpu.pipeline_mode<synchronous>, transform_indices = @transform_0, window_bounds = array<i64: 1, 8, 128>}, {transform_indices = @transform_1, window_bounds = array<i64: 2, 8, 128>}, {transform_indices = @transform_2, window_bounds = array<i64: 2, 8, 128>}]} {
    %0 = tpu.iota {dimensions = array<i32: 2>} : vector<1x1x128xi32>
    %c0_i32 = arith.constant 0 : i32
    %1 = vector.broadcast %c0_i32 : i32 to vector<1x1x128xi32>
    %2 = arith.addi %0, %1 : vector<1x1x128xi32>
    %c0 = arith.constant 0 : index
    %c0_0 = arith.constant 0 : index
    %c0_1 = arith.constant 0 : index
    %3 = vector.load %arg1[%c0, %c0_0, %c0_1] : memref<1x8x128xf32, #tpu.memory_space<vmem>>, vector<1x8x128xf32>
    %c0_2 = arith.constant 0 : index
    %c0_3 = arith.constant 0 : index
    %c0_4 = arith.constant 0 : index
    %4 = vector.load %arg2[%c0_2, %c0_3, %c0_4] : memref<2x8x128xf32, #tpu.memory_space<vmem>>, vector<2x8x128xf32>
    %c48_i32 = arith.constant 48 : i32
    %5 = vector.broadcast %c48_i32 : i32 to vector<1x1x128xi32>
    %6 = arith.cmpi slt, %2, %5 : vector<1x1x128xi32>
    %7 = vector.shape_cast %6 : vector<1x1x128xi1> to vector<1x1x128xi1>
    %8 = vector.broadcast %7 : vector<1x1x128xi1> to vector<2x8x128xi1>
    %9 = vector.shape_cast %3 : vector<1x8x128xf32> to vector<1x8x128xf32>
    %10 = vector.broadcast %9 : vector<1x8x128xf32> to vector<2x8x128xf32>
    %11 = arith.select %8, %10, %4 : vector<2x8x128xi1>, vector<2x8x128xf32>
    %c0_5 = arith.constant 0 : index
    %c0_6 = arith.constant 0 : index
    %c0_7 = arith.constant 0 : index
    %12 = vector.load %arg3[%c0_5, %c0_6, %c0_7] : memref<2x8x128xf32, #tpu.memory_space<vmem>>, vector<2x8x128xf32>
    tpu.vector_store %arg3[%c0_5, %c0_6, %c0_7], %11 {strides = array<i32>} : memref<2x8x128xf32, #tpu.memory_space<vmem>>, vector<2x8x128xf32>,
    return
  }
  func.func @transform_0(%arg0: i32) -> (i32, i32, i32) {
    %c0_i32 = arith.constant 0 : i32
    %c0_i32_0 = arith.constant 0 : i32
    %c0_i32_1 = arith.constant 0 : i32
    %c0_i32_2 = arith.constant 0 : i32
    return %c0_i32, %c0_i32_0, %c0_i32_1 : i32, i32, i32
  }
  func.func @transform_1(%arg0: i32) -> (i32, i32, i32) {
    %c0_i32 = arith.constant 0 : i32
    %c0_i32_0 = arith.constant 0 : i32
    %c0_i32_1 = arith.constant 0 : i32
    return %arg0, %c0_i32, %c0_i32_0 : i32, i32, i32
  }
  func.func @transform_2(%arg0: i32) -> (i32, i32, i32) {
    %c0_i32 = arith.constant 0 : i32
    %c0_i32_0 = arith.constant 0 : i32
    %c0_i32_1 = arith.constant 0 : i32
    return %arg0, %c0_i32, %c0_i32_0 : i32, i32, i32
  }
}

</mosaic_0001>

<llo_original>
// kernel: _soft_prompting_forward_impl.1
$region0: #{_soft_prompting_forward_impl.1}
  #allocation0 [shape = 'u32[]', space=smem, size = 0x4, offset = 0x4, fixed_abs, tag = 'smem constant byte address 0x4 - core index']
  #allocation1 [shape = 'u32[144,128]{1,0:T(1,128)}', space=vmem, size = 0x12000, scoped, tag = 'internal scratch']
  %s0 = inlined_call_operand.vmem [shape: f32[1,8,128], index: 0, kind: input, shape index: {}]
  %s1 = inlined_call_operand.hbm [shape: f32[2,8,256], index: 1, kind: input, shape index: {}, may-alias: {1,2}]
  %s2 = inlined_call_operand.hbm [shape: f32[2,8,256], index: 2, kind: output, shape index: {}, may-alias: {1,2}]
  %s3 = sld [smem:[#allocation0]]
  $region22: #{_soft_prompting_forward_impl.1} parent=0
    _
  %s5 = ssub.s32 1, %s3
  %s6 = scalar_select 0, %s5, %s3
  $region1: #{_soft_prompting_forward_impl.1} parent=0
    #allocation2 [shape = 'u8[8192]{0}', space=vmem, size = 0x2000, scoped, tag = 'input window, operand 1, single buffered']
    #allocation3 [shape = 's32[1]{0}', space=sflag, size = 0x4, scoped, tag = 'scoped memory for _soft_prompting_forward_impl.1']
    #allocation4 [shape = 's32[1]{0}', space=sflag, size = 0x4, scoped, tag = 'scoped memory for _soft_prompting_forward_impl.1']
    #allocation5 [shape = 'u8[8192]{0}', space=vmem, size = 0x2000, scoped, tag = 'output window, operand 0, single buffered']
    %7 = vsyncpa [#allocation3], 0
    %8 = vsyncpa [#allocation4], 0
    // Predicated region
    $region2: #{_soft_prompting_forward_impl.1} parent=1 // pred_check
      _
    $region3: #{_soft_prompting_forward_impl.1} parent=1 // pred_check_branch
      %10 = sbr.rel (0) target = $region5
    $region4: #{_soft_prompting_forward_impl.1} parent=1 // pred_region
      _
    $region5: #{_soft_prompting_forward_impl.1} parent=1 // pred_fallthru
      _
    // Predicated region
    $region6: #{_soft_prompting_forward_impl.1} parent=1 // pred_check
      _
    $region7: #{_soft_prompting_forward_impl.1} parent=1 // pred_check_branch
      %12 = sbr.rel (0) target = $region9
    $region8: #{_soft_prompting_forward_impl.1} parent=1 // pred_region
      %s14 = ssub.s32 256, 256
      %15 = vsyncadd [#allocation3], %s14
      %s16 = sshll.u32 [#allocation2], 4
      %s17 = int_to_ptr.vmem [resolvable:$true] %s16
      %22 = dma.hbm_to_vmem [thread:$0]  %s1, 256, %s17, [#allocation3], 256, 128, 8
    $region9: #{_soft_prompting_forward_impl.1} parent=1 // pred_fallthru
      _
    // Predicated region
    $region10: #{_soft_prompting_forward_impl.1} parent=1 // pred_check
      _
    $region11: #{_soft_prompting_forward_impl.1} parent=1 // pred_check_branch
      %24 = sbr.rel (0) target = $region13
    $region12: #{_soft_prompting_forward_impl.1} parent=1 // pred_region
      %25 = dma.done [#allocation3], 256
    $region13: #{_soft_prompting_forward_impl.1} parent=1 // pred_fallthru
      _
    %v26 = vlaneseq
    %v27 = vand.u32 %v26, 127
    %v28 = vld [vmem:[%s0] sm:$0xff]
    %v29 = vld [vmem:[#allocation2] sm:$0xff]
    %v30 = vld [vmem:[#allocation2 + $0x8] sm:$0xff]
    %vm31 = vcmp.lt.s32.totalorder %v27, 48
    %v32 = vsel %vm31, 1, 0
    %vm33 = vcmp.eq.s32.totalorder %v32, 1
    %v34 = vsel %vm33, %v28, %v29
    %v35 = vsel %vm33, %v28, %v30
    %36 = vst [vmem:[#allocation5] sm:$0xff] %v34
    %37 = vst [vmem:[#allocation5 + $0x8] sm:$0xff] %v35
    // Predicated region
    $region14: #{_soft_prompting_forward_impl.1} parent=1 // pred_check
      _
    $region15: #{_soft_prompting_forward_impl.1} parent=1 // pred_check_branch
      %39 = sbr.rel (0) target = $region17
    $region16: #{_soft_prompting_forward_impl.1} parent=1 // pred_region
      %s41 = ssub.s32 256, 256
      %42 = vsyncadd [#allocation4], %s41
      %s43 = sshll.u32 [#allocation5], 4
      %s44 = int_to_ptr.vmem [resolvable:$true] %s43
      %49 = dma.vmem_to_hbm [thread:$0]  %s44, 256, %s2, [#allocation4], 128, 256, 8
    $region17: #{_soft_prompting_forward_impl.1} parent=1 // pred_fallthru
      _
    // Predicated region
    $region18: #{_soft_prompting_forward_impl.1} parent=1 // pred_check
      _
    $region19: #{_soft_prompting_forward_impl.1} parent=1 // pred_check_branch
      %51 = sbr.rel (0) target = $region21
    $region20: #{_soft_prompting_forward_impl.1} parent=1 // pred_region
      %52 = dma.done [#allocation4], 256
    $region21: #{_soft_prompting_forward_impl.1} parent=1 // pred_fallthru
      _
    %53 = vsyncpa [#allocation3], 1
    %54 = vsyncpa [#allocation4], 1

</llo_original>
